<compile_context>
chip_gen: v5e
topology: v5e:2x2
jax: 0.10.0
libtpu: 0.0.40
codegen_flags: <defaults>
</compile_context>

<pallas_src>
import jax
import jax.numpy as jnp
from jax.experimental import pallas as pl
from jax.experimental.pallas import tpu as pltpu

D = 8                      # output_space.dimension == input_dim
HIDDEN = 32                # hidden_dim
PHI_HIDDEN = HIDDEN // 2   # phi network hidden size
NUM_THOUGHT_STEPS = 5      # num_thought_steps
NUM_STATES = 2 ** D        # full binary hypercube (enumerable since D <= 10)
FINAL_TEMP = 1.0           # MCMCConfig.final_temp

LANES = 128                # lane width of packed slabs
OUT_ROWS = 8               # packed output slab rows

# Packed parameter slab row layout (one DMA for all 10 parameter tensors).
_R_W1 = 0                        # w1 (D, HIDDEN)            rows  0:8,  lanes 0:32
_R_W2 = _R_W1 + D                # w2 (HIDDEN, HIDDEN)       rows  8:40, lanes 0:32
_R_W3 = _R_W2 + HIDDEN           # w3 (HIDDEN, D)            rows 40:72, lanes 0:8
_R_PW1 = _R_W3 + HIDDEN          # pw1^T (PHI_HIDDEN, D)     rows 72:88, lanes 0:8
                                 # pb1 column (PHI_HIDDEN,1)  rows 72:88, lane 8
_R_VEC = _R_PW1 + PHI_HIDDEN     # row 88: b1 | 89: b2 | 90: b3 | 91: pw2^T | 92: pb2
PARAM_ROWS = 96                  # padded to a multiple of 8 sublanes
ACT_ROWS = 8                     # row 0: x, row 1: target


# --------------------------------------------------------------------------
# Fused kernel: think loop + phi network + exact Gibbs expectation + FY loss.
# --------------------------------------------------------------------------
def _ctm_fy_kernel(p_ref, act_ref, out_ref):
    f32 = jnp.float32

    # ---- 0. Views into the two packed VMEM slabs (static slices). ----
    w1 = p_ref[_R_W1:_R_W1 + D, 0:HIDDEN]                       # (8, 32)
    w2 = p_ref[_R_W2:_R_W2 + HIDDEN, 0:HIDDEN]                  # (32, 32)
    w3 = p_ref[_R_W3:_R_W3 + HIDDEN, 0:D]                       # (32, 8)
    pw1_t = p_ref[_R_PW1:_R_PW1 + PHI_HIDDEN, 0:D]              # (16, 8)
    pb1_c = p_ref[_R_PW1:_R_PW1 + PHI_HIDDEN, D:D + 1]          # (16, 1) column bias
    b1 = p_ref[_R_VEC + 0:_R_VEC + 1, 0:HIDDEN]                 # (1, 32)
    b2 = p_ref[_R_VEC + 1:_R_VEC + 2, 0:HIDDEN]                 # (1, 32)
    b3 = p_ref[_R_VEC + 2:_R_VEC + 3, 0:D]                      # (1, 8)
    pw2_t = p_ref[_R_VEC + 3:_R_VEC + 4, 0:PHI_HIDDEN]          # (1, 16)
    pb2 = p_ref[_R_VEC + 4:_R_VEC + 5, 0:1]                     # (1, 1)
    x = act_ref[0:1, 0:D]                                       # (1, 8)
    target = act_ref[1:2, 0:D]                                  # (1, 8)

    # ---- 1. theta-INDEPENDENT phi path (overlaps the serial think loop). ----
    # Enumerate {0,1}^D in lane-dense (D, S) layout with two iotas (no stores).
    shift = jax.lax.broadcasted_iota(jnp.int32, (D, NUM_STATES), 0)   # sublane = bit
    idx = jax.lax.broadcasted_iota(jnp.int32, (D, NUM_STATES), 1)     # lane = state id
    states_t = ((idx >> shift) & 1).astype(f32)                        # (8, 256)

    h_t = jnp.maximum(
        jnp.dot(pw1_t, states_t, preferred_element_type=f32) + pb1_c, 0.0)   # (16, 256)
    phi_row = jnp.dot(pw2_t, h_t, preferred_element_type=f32) + pb2          # (1, 256)

    # ---- 2. CTM "think" loop (5 static iterations, 15 dependent M=1 dots). ----
    # TODO(synk): hold w1/w2/w3 resident via pltpu.matmul_push_rhs/acc_lhs/pop
    # (and try a VPU broadcast-mul-reduce path on v5e) only after a bundle-dump
    # comparison confirms a win for these tiny, non-MXU-shaped matmuls.
    t = x
    for _ in range(NUM_THOUGHT_STEPS):                                 # static unroll
        h = jnp.maximum(jnp.dot(t, w1, preferred_element_type=f32) + b1, 0.0)
        h = jnp.maximum(jnp.dot(h, w2, preferred_element_type=f32) + b2, 0.0)
        t = jnp.dot(h, w3, preferred_element_type=f32) + b3
    theta = t                                                          # (1, 8)

    # ---- 3. Exact Gibbs expectation + Fenchel-Young loss (theta tail). ----
    # TODO(synk): the Metropolis-Hastings MCMC chains (python `random`,
    # sequential accept/reject, annealing, persistent chains, acceptance /
    # entropy diagnostics) have no clean Pallas equivalent; the expectation
    # they estimate is computed exactly at final_temp.
    energy = jnp.dot(theta, states_t, preferred_element_type=f32) + phi_row  # (1, 256)
    logits = energy * (1.0 / FINAL_TEMP)
    m = jnp.max(logits, axis=1, keepdims=True)                         # (1, 1)
    p = jnp.exp(logits - m)                                            # (1, 256) unnormalized
    sum_p = jnp.sum(p, axis=1, keepdims=True)                          # (1, 1)
    e_un = jax.lax.dot_general(p, states_t, (((1,), (1,)), ((), ())),
                               preferred_element_type=f32)             # (1, 8)
    expectation = e_un * pl.reciprocal(sum_p)                          # exact 1/x, (1,1) scale
    gradient = expectation - target                                    # (1, 8)
    loss = jnp.sum(theta * gradient, axis=1, keepdims=True)            # (1, 1)

    # ---- 4. Assemble lane-dense output slab in registers, one full store. ----
    pad = jnp.zeros((1, LANES - D), f32)
    out_ref[...] = jnp.concatenate(
        [jnp.concatenate([theta, pad], axis=1),
         jnp.concatenate([expectation, pad], axis=1),
         jnp.concatenate([gradient, pad], axis=1),
         jnp.concatenate([loss, jnp.zeros((1, LANES - 1), f32)], axis=1),
         jnp.zeros((OUT_ROWS - 4, LANES), f32)],
        axis=0)


# --------------------------------------------------------------------------
# Wrapper
# --------------------------------------------------------------------------
def pack_params(thought_params, phi_params):
    """Pack all parameters into one (96,128) f32 slab (done once, amortized).

    thought_params: (w1 (D,H), b1 (1,H), w2 (H,H), b2 (1,H), w3 (H,D), b3 (1,D))
                    stored so a layer is  y = x @ W + b.
    phi_params:     (pw1 (D,PHI_H), pb1 (1,PHI_H), pw2 (PHI_H,1), pb2 (1,1)).
    """
    w1, b1, w2, b2, w3, b3 = thought_params
    pw1, pb1, pw2, pb2 = phi_params
    slab = jnp.zeros((PARAM_ROWS, LANES), jnp.float32)
    slab = slab.at[_R_W1:_R_W1 + D, 0:HIDDEN].set(w1)
    slab = slab.at[_R_W2:_R_W2 + HIDDEN, 0:HIDDEN].set(w2)
    slab = slab.at[_R_W3:_R_W3 + HIDDEN, 0:D].set(w3)
    slab = slab.at[_R_PW1:_R_PW1 + PHI_HIDDEN, 0:D].set(pw1.T)
    slab = slab.at[_R_PW1:_R_PW1 + PHI_HIDDEN, D:D + 1].set(pb1.reshape(PHI_HIDDEN, 1))
    slab = slab.at[_R_VEC + 0, 0:HIDDEN].set(b1.reshape(HIDDEN))
    slab = slab.at[_R_VEC + 1, 0:HIDDEN].set(b2.reshape(HIDDEN))
    slab = slab.at[_R_VEC + 2, 0:D].set(b3.reshape(D))
    slab = slab.at[_R_VEC + 3, 0:PHI_HIDDEN].set(pw2.reshape(PHI_HIDDEN))
    slab = slab.at[_R_VEC + 4, 0:1].set(pb2.reshape(1))
    return slab


def ctm_fy_forward(x, target, param_slab):
    """Full forward: returns dict like the PyTorch module (loss, final_theta, stats)."""
    # TODO(synk): if multiple CTM instances are ever run, add a leading batch
    # dim and a "parallel" grid axis so work shards across v7x's 2 TensorCores
    # and the fixed launch/DMA overhead amortizes.
    act = jnp.zeros((ACT_ROWS, LANES), jnp.float32)
    act = act.at[0, 0:D].set(x.reshape(D))
    act = act.at[1, 0:D].set(target.reshape(D))

    vmem = lambda: pl.BlockSpec(memory_space=pltpu.MemorySpace.VMEM)
    slab = pl.pallas_call(
        _ctm_fy_kernel,
        out_shape=jax.ShapeDtypeStruct((OUT_ROWS, LANES), jnp.float32),
        in_specs=[vmem(), vmem()],
        out_specs=vmem(),
    )(param_slab, act)

    theta = slab[0:1, 0:D]
    expectation = slab[1:2, 0:D]
    gradient = slab[2:3, 0:D]
    loss = slab[3, 0]
    return {
        "loss": loss,
        "final_theta": theta,
        "mcmc_stats": {"expectation": expectation, "gradient": gradient},
    }


# --------------------------------------------------------------------------
# Driver
# --------------------------------------------------------------------------
if __name__ == "__main__":
    key = jax.random.PRNGKey(0)
    keys = jax.random.split(key, 12)

    def lin_init(kw, kb, fan_in, fan_out):
        bound = 1.0 / (fan_in ** 0.5)           # PyTorch nn.Linear default init range
        W = jax.random.uniform(kw, (fan_in, fan_out), jnp.float32, -bound, bound)
        b = jax.random.uniform(kb, (1, fan_out), jnp.float32, -bound, bound)
        return W, b

    w1, b1 = lin_init(keys[0], keys[1], D, HIDDEN)
    w2, b2 = lin_init(keys[2], keys[3], HIDDEN, HIDDEN)
    w3, b3 = lin_init(keys[4], keys[5], HIDDEN, D)
    pw1, pb1 = lin_init(keys[6], keys[7], D, PHI_HIDDEN)   # (8,16), (1,16)
    pw2, pb2 = lin_init(keys[8], keys[9], PHI_HIDDEN, 1)   # (16,1), (1,1)

    x = jax.random.normal(keys[10], (1, D), jnp.float32)
    target = (jax.random.uniform(keys[11], (1, D)) > 0.5).astype(jnp.float32)

    thought_params = (w1, b1, w2, b2, w3, b3)
    phi_params = (pw1, pb1, pw2, pb2)
    param_slab = pack_params(thought_params, phi_params)   # packed once

    result = ctm_fy_forward(x, target, param_slab)
    jax.block_until_ready(result)

    # ---------------- pure-JAX reference check ----------------
    t = x
    for _ in range(NUM_THOUGHT_STEPS):
        h = jnp.maximum(t @ w1 + b1, 0.0)
        h = jnp.maximum(h @ w2 + b2, 0.0)
        t = h @ w3 + b3
    idx = jnp.arange(NUM_STATES, dtype=jnp.int32)
    states = ((idx[:, None] >> jnp.arange(D, dtype=jnp.int32)[None, :]) & 1).astype(jnp.float32)
    phi = jnp.maximum(states @ pw1 + pb1, 0.0) @ pw2 + pb2
    energy = jnp.sum(states * t, axis=1, keepdims=True) + phi
    wts = jax.nn.softmax(energy / FINAL_TEMP, axis=0)
    e_ref = jnp.sum(wts * states, axis=0, keepdims=True)
    g_ref = e_ref - target
    l_ref = jnp.sum(t * e_ref) - jnp.sum(t * target)

    assert jnp.allclose(result["final_theta"], t, atol=1e-4), "theta mismatch"
    assert jnp.allclose(result["mcmc_stats"]["expectation"], e_ref, atol=1e-4), "expectation mismatch"
    assert jnp.allclose(result["mcmc_stats"]["gradient"], g_ref, atol=1e-4), "gradient mismatch"
    assert jnp.allclose(result["loss"], l_ref, atol=1e-4), "loss mismatch"

    print("KERNEL_OK")
</pallas_src>

<mosaic_0001>
module attributes {stable_mosaic.version = 11 : i64} {
  func.func @_ctm_fy_kernel(%arg0: memref<96x128xf32, #tpu.memory_space<vmem>>, %arg1: memref<8x128xf32, #tpu.memory_space<vmem>>, %arg2: memref<8x128xf32, #tpu.memory_space<vmem>>) attributes {dimension_semantics = [], scalar_prefetch = 0 : i64, scratch_operands = 0 : i64, tpu.core_type = #tpu.core_type<tc>} {
    %c0 = arith.constant 0 : index
    %c0_0 = arith.constant 0 : index
    %0 = vector.load %arg0[%c0, %c0_0] : memref<96x128xf32, #tpu.memory_space<vmem>>, vector<8x32xf32>
    %c8 = arith.constant 8 : index
    %c0_1 = arith.constant 0 : index
    %1 = vector.load %arg0[%c8, %c0_1] : memref<96x128xf32, #tpu.memory_space<vmem>>, vector<32x32xf32>
    %c40 = arith.constant 40 : index
    %c0_2 = arith.constant 0 : index
    %2 = vector.load %arg0[%c40, %c0_2] : memref<96x128xf32, #tpu.memory_space<vmem>>, vector<32x8xf32>
    %c72 = arith.constant 72 : index
    %c0_3 = arith.constant 0 : index
    %3 = vector.load %arg0[%c72, %c0_3] : memref<96x128xf32, #tpu.memory_space<vmem>>, vector<16x8xf32>
    %c72_4 = arith.constant 72 : index
    %c8_5 = arith.constant 8 : index
    %4 = vector.load %arg0[%c72_4, %c8_5] : memref<96x128xf32, #tpu.memory_space<vmem>>, vector<16x1xf32>
    %c88 = arith.constant 88 : index
    %c0_6 = arith.constant 0 : index
    %5 = vector.load %arg0[%c88, %c0_6] : memref<96x128xf32, #tpu.memory_space<vmem>>, vector<1x32xf32>
    %c89 = arith.constant 89 : index
    %c0_7 = arith.constant 0 : index
    %6 = vector.load %arg0[%c89, %c0_7] : memref<96x128xf32, #tpu.memory_space<vmem>>, vector<1x32xf32>
    %c90 = arith.constant 90 : index
    %c0_8 = arith.constant 0 : index
    %7 = vector.load %arg0[%c90, %c0_8] : memref<96x128xf32, #tpu.memory_space<vmem>>, vector<1x8xf32>
    %c91 = arith.constant 91 : index
    %c0_9 = arith.constant 0 : index
    %8 = vector.load %arg0[%c91, %c0_9] : memref<96x128xf32, #tpu.memory_space<vmem>>, vector<1x16xf32>
    %c92 = arith.constant 92 : index
    %c0_10 = arith.constant 0 : index
    %9 = vector.load %arg0[%c92, %c0_10] : memref<96x128xf32, #tpu.memory_space<vmem>>, vector<1x1xf32>
    %c0_11 = arith.constant 0 : index
    %c0_12 = arith.constant 0 : index
    %10 = vector.load %arg1[%c0_11, %c0_12] : memref<8x128xf32, #tpu.memory_space<vmem>>, vector<1x8xf32>
    %c1 = arith.constant 1 : index
    %c0_13 = arith.constant 0 : index
    %11 = vector.load %arg1[%c1, %c0_13] : memref<8x128xf32, #tpu.memory_space<vmem>>, vector<1x8xf32>
    %12 = tpu.iota {dimensions = array<i32: 0>} : vector<8x256xi32>
    %13 = tpu.iota {dimensions = array<i32: 1>} : vector<8x256xi32>
    %14 = arith.shrsi %13, %12 : vector<8x256xi32>
    %c1_i32 = arith.constant 1 : i32
    %15 = vector.broadcast %c1_i32 : i32 to vector<8x256xi32>
    %16 = arith.andi %14, %15 : vector<8x256xi32>
    %17 = arith.sitofp %16 : vector<8x256xi32> to vector<8x256xf32>
    %cst = arith.constant dense<0.000000e+00> : vector<16x256xf32>
    %18 = tpu.matmul %3, %17, %cst {dimension_numbers = #tpu.dot_dimension_numbers<[1], [0], [0], [1], [0, 0, 1, 1], [], []>} : vector<16x8xf32>, vector<8x256xf32>, vector<16x256xf32> -> vector<16x256xf32>
    %19 = vector.broadcast %4 : vector<16x1xf32> to vector<16x256xf32>
    %20 = arith.addf %18, %19 : vector<16x256xf32>
    %cst_14 = arith.constant 0.000000e+00 : f32
    %21 = vector.broadcast %cst_14 : f32 to vector<16x256xf32>
    %22 = arith.maximumf %20, %21 : vector<16x256xf32>
    %cst_15 = arith.constant dense<0.000000e+00> : vector<1x256xf32>
    %23 = tpu.matmul %8, %22, %cst_15 {dimension_numbers = #tpu.dot_dimension_numbers<[1], [0], [0], [1], [0, 0, 1, 1], [], []>} : vector<1x16xf32>, vector<16x256xf32>, vector<1x256xf32> -> vector<1x256xf32>
    %24 = vector.broadcast %9 : vector<1x1xf32> to vector<1x256xf32>
    %25 = arith.addf %23, %24 : vector<1x256xf32>
    %cst_16 = arith.constant dense<0.000000e+00> : vector<1x32xf32>
    %26 = tpu.matmul %10, %0, %cst_16 {dimension_numbers = #tpu.dot_dimension_numbers<[1], [0], [0], [1], [0, 0, 1, 1], [], []>} : vector<1x8xf32>, vector<8x32xf32>, vector<1x32xf32> -> vector<1x32xf32>
    %27 = arith.addf %26, %5 : vector<1x32xf32>
    %cst_17 = arith.constant 0.000000e+00 : f32
    %28 = vector.broadcast %cst_17 : f32 to vector<1x32xf32>
    %29 = arith.maximumf %27, %28 : vector<1x32xf32>
    %cst_18 = arith.constant dense<0.000000e+00> : vector<1x32xf32>
    %30 = tpu.matmul %29, %1, %cst_18 {dimension_numbers = #tpu.dot_dimension_numbers<[1], [0], [0], [1], [0, 0, 1, 1], [], []>} : vector<1x32xf32>, vector<32x32xf32>, vector<1x32xf32> -> vector<1x32xf32>
    %31 = arith.addf %30, %6 : vector<1x32xf32>
    %cst_19 = arith.constant 0.000000e+00 : f32
    %32 = vector.broadcast %cst_19 : f32 to vector<1x32xf32>
    %33 = arith.maximumf %31, %32 : vector<1x32xf32>
    %cst_20 = arith.constant dense<0.000000e+00> : vector<1x8xf32>
    %34 = tpu.matmul %33, %2, %cst_20 {dimension_numbers = #tpu.dot_dimension_numbers<[1], [0], [0], [1], [0, 0, 1, 1], [], []>} : vector<1x32xf32>, vector<32x8xf32>, vector<1x8xf32> -> vector<1x8xf32>
    %35 = arith.addf %34, %7 : vector<1x8xf32>
    %cst_21 = arith.constant dense<0.000000e+00> : vector<1x32xf32>
    %36 = tpu.matmul %35, %0, %cst_21 {dimension_numbers = #tpu.dot_dimension_numbers<[1], [0], [0], [1], [0, 0, 1, 1], [], []>} : vector<1x8xf32>, vector<8x32xf32>, vector<1x32xf32> -> vector<1x32xf32>
    %37 = arith.addf %36, %5 : vector<1x32xf32>
    %cst_22 = arith.constant 0.000000e+00 : f32
    %38 = vector.broadcast %cst_22 : f32 to vector<1x32xf32>
    %39 = arith.maximumf %37, %38 : vector<1x32xf32>
    %cst_23 = arith.constant dense<0.000000e+00> : vector<1x32xf32>
    %40 = tpu.matmul %39, %1, %cst_23 {dimension_numbers = #tpu.dot_dimension_numbers<[1], [0], [0], [1], [0, 0, 1, 1], [], []>} : vector<1x32xf32>, vector<32x32xf32>, vector<1x32xf32> -> vector<1x32xf32>
    %41 = arith.addf %40, %6 : vector<1x32xf32>
    %cst_24 = arith.constant 0.000000e+00 : f32
    %42 = vector.broadcast %cst_24 : f32 to vector<1x32xf32>
    %43 = arith.maximumf %41, %42 : vector<1x32xf32>
    %cst_25 = arith.constant dense<0.000000e+00> : vector<1x8xf32>
    %44 = tpu.matmul %43, %2, %cst_25 {dimension_numbers = #tpu.dot_dimension_numbers<[1], [0], [0], [1], [0, 0, 1, 1], [], []>} : vector<1x32xf32>, vector<32x8xf32>, vector<1x8xf32> -> vector<1x8xf32>
    %45 = arith.addf %44, %7 : vector<1x8xf32>
    %cst_26 = arith.constant dense<0.000000e+00> : vector<1x32xf32>
    %46 = tpu.matmul %45, %0, %cst_26 {dimension_numbers = #tpu.dot_dimension_numbers<[1], [0], [0], [1], [0, 0, 1, 1], [], []>} : vector<1x8xf32>, vector<8x32xf32>, vector<1x32xf32> -> vector<1x32xf32>
    %47 = arith.addf %46, %5 : vector<1x32xf32>
    %cst_27 = arith.constant 0.000000e+00 : f32
    %48 = vector.broadcast %cst_27 : f32 to vector<1x32xf32>
    %49 = arith.maximumf %47, %48 : vector<1x32xf32>
    %cst_28 = arith.constant dense<0.000000e+00> : vector<1x32xf32>
    %50 = tpu.matmul %49, %1, %cst_28 {dimension_numbers = #tpu.dot_dimension_numbers<[1], [0], [0], [1], [0, 0, 1, 1], [], []>} : vector<1x32xf32>, vector<32x32xf32>, vector<1x32xf32> -> vector<1x32xf32>
    %51 = arith.addf %50, %6 : vector<1x32xf32>
    %cst_29 = arith.constant 0.000000e+00 : f32
    %52 = vector.broadcast %cst_29 : f32 to vector<1x32xf32>
    %53 = arith.maximumf %51, %52 : vector<1x32xf32>
    %cst_30 = arith.constant dense<0.000000e+00> : vector<1x8xf32>
    %54 = tpu.matmul %53, %2, %cst_30 {dimension_numbers = #tpu.dot_dimension_numbers<[1], [0], [0], [1], [0, 0, 1, 1], [], []>} : vector<1x32xf32>, vector<32x8xf32>, vector<1x8xf32> -> vector<1x8xf32>
    %55 = arith.addf %54, %7 : vector<1x8xf32>
    %cst_31 = arith.constant dense<0.000000e+00> : vector<1x32xf32>
    %56 = tpu.matmul %55, %0, %cst_31 {dimension_numbers = #tpu.dot_dimension_numbers<[1], [0], [0], [1], [0, 0, 1, 1], [], []>} : vector<1x8xf32>, vector<8x32xf32>, vector<1x32xf32> -> vector<1x32xf32>
    %57 = arith.addf %56, %5 : vector<1x32xf32>
    %cst_32 = arith.constant 0.000000e+00 : f32
    %58 = vector.broadcast %cst_32 : f32 to vector<1x32xf32>
    %59 = arith.maximumf %57, %58 : vector<1x32xf32>
    %cst_33 = arith.constant dense<0.000000e+00> : vector<1x32xf32>
    %60 = tpu.matmul %59, %1, %cst_33 {dimension_numbers = #tpu.dot_dimension_numbers<[1], [0], [0], [1], [0, 0, 1, 1], [], []>} : vector<1x32xf32>, vector<32x32xf32>, vector<1x32xf32> -> vector<1x32xf32>
    %61 = arith.addf %60, %6 : vector<1x32xf32>
    %cst_34 = arith.constant 0.000000e+00 : f32
    %62 = vector.broadcast %cst_34 : f32 to vector<1x32xf32>
    %63 = arith.maximumf %61, %62 : vector<1x32xf32>
    %cst_35 = arith.constant dense<0.000000e+00> : vector<1x8xf32>
    %64 = tpu.matmul %63, %2, %cst_35 {dimension_numbers = #tpu.dot_dimension_numbers<[1], [0], [0], [1], [0, 0, 1, 1], [], []>} : vector<1x32xf32>, vector<32x8xf32>, vector<1x8xf32> -> vector<1x8xf32>
    %65 = arith.addf %64, %7 : vector<1x8xf32>
    %cst_36 = arith.constant dense<0.000000e+00> : vector<1x32xf32>
    %66 = tpu.matmul %65, %0, %cst_36 {dimension_numbers = #tpu.dot_dimension_numbers<[1], [0], [0], [1], [0, 0, 1, 1], [], []>} : vector<1x8xf32>, vector<8x32xf32>, vector<1x32xf32> -> vector<1x32xf32>
    %67 = arith.addf %66, %5 : vector<1x32xf32>
    %cst_37 = arith.constant 0.000000e+00 : f32
    %68 = vector.broadcast %cst_37 : f32 to vector<1x32xf32>
    %69 = arith.maximumf %67, %68 : vector<1x32xf32>
    %cst_38 = arith.constant dense<0.000000e+00> : vector<1x32xf32>
    %70 = tpu.matmul %69, %1, %cst_38 {dimension_numbers = #tpu.dot_dimension_numbers<[1], [0], [0], [1], [0, 0, 1, 1], [], []>} : vector<1x32xf32>, vector<32x32xf32>, vector<1x32xf32> -> vector<1x32xf32>
    %71 = arith.addf %70, %6 : vector<1x32xf32>
    %cst_39 = arith.constant 0.000000e+00 : f32
    %72 = vector.broadcast %cst_39 : f32 to vector<1x32xf32>
    %73 = arith.maximumf %71, %72 : vector<1x32xf32>
    %cst_40 = arith.constant dense<0.000000e+00> : vector<1x8xf32>
    %74 = tpu.matmul %73, %2, %cst_40 {dimension_numbers = #tpu.dot_dimension_numbers<[1], [0], [0], [1], [0, 0, 1, 1], [], []>} : vector<1x32xf32>, vector<32x8xf32>, vector<1x8xf32> -> vector<1x8xf32>
    %75 = arith.addf %74, %7 : vector<1x8xf32>
    %cst_41 = arith.constant dense<0.000000e+00> : vector<1x256xf32>
    %76 = tpu.matmul %75, %17, %cst_41 {dimension_numbers = #tpu.dot_dimension_numbers<[1], [0], [0], [1], [0, 0, 1, 1], [], []>} : vector<1x8xf32>, vector<8x256xf32>, vector<1x256xf32> -> vector<1x256xf32>
    %77 = arith.addf %76, %25 : vector<1x256xf32>
    %cst_42 = arith.constant 1.000000e+00 : f32
    %78 = vector.broadcast %cst_42 : f32 to vector<1x256xf32>
    %79 = arith.mulf %77, %78 : vector<1x256xf32>
    %cst_43 = arith.constant dense<0xFF800000> : vector<1xf32>
    %80 = vector.multi_reduction <maximumf>, %79, %cst_43 [1] : vector<1x256xf32> to vector<1xf32>
    %81 = vector.shape_cast %80 : vector<1xf32> to vector<1x1xf32>
    %82 = vector.broadcast %81 : vector<1x1xf32> to vector<1x256xf32>
    %83 = arith.subf %79, %82 : vector<1x256xf32>
    %84 = math.exp %83 : vector<1x256xf32>
    %cst_44 = arith.constant dense<0.000000e+00> : vector<1xf32>
    %85 = vector.multi_reduction <add>, %84, %cst_44 [1] : vector<1x256xf32> to vector<1xf32>
    %86 = vector.shape_cast %85 : vector<1xf32> to vector<1x1xf32>
    %cst_45 = arith.constant dense<0.000000e+00> : vector<1x8xf32>
    %87 = tpu.matmul %84, %17, %cst_45 {dimension_numbers = #tpu.dot_dimension_numbers<[1], [1], [0], [0], [0, 0, 1, 0], [], []>} : vector<1x256xf32>, vector<8x256xf32>, vector<1x8xf32> -> vector<1x8xf32>
    %88 = tpu.reciprocal %86 : vector<1x1xf32> -> vector<1x1xf32>
    %89 = vector.broadcast %88 : vector<1x1xf32> to vector<1x8xf32>
    %90 = arith.mulf %87, %89 : vector<1x8xf32>
    %91 = arith.subf %90, %11 : vector<1x8xf32>
    %92 = arith.mulf %75, %91 : vector<1x8xf32>
    %cst_46 = arith.constant dense<0.000000e+00> : vector<1xf32>
    %93 = vector.multi_reduction <add>, %92, %cst_46 [1] : vector<1x8xf32> to vector<1xf32>
    %94 = vector.shape_cast %93 : vector<1xf32> to vector<1x1xf32>
    %cst_47 = arith.constant 0.000000e+00 : f32
    %95 = vector.broadcast %cst_47 : f32 to vector<1x120xf32>
    %96 = tpu.concatenate %75, %95 in 1 : vector<1x8xf32>, vector<1x120xf32> -> vector<1x128xf32>
    %97 = tpu.concatenate %90, %95 in 1 : vector<1x8xf32>, vector<1x120xf32> -> vector<1x128xf32>
    %98 = tpu.concatenate %91, %95 in 1 : vector<1x8xf32>, vector<1x120xf32> -> vector<1x128xf32>
    %cst_48 = arith.constant 0.000000e+00 : f32
    %99 = vector.broadcast %cst_48 : f32 to vector<1x127xf32>
    %100 = tpu.concatenate %94, %99 in 1 : vector<1x1xf32>, vector<1x127xf32> -> vector<1x128xf32>
    %cst_49 = arith.constant 0.000000e+00 : f32
    %101 = vector.broadcast %cst_49 : f32 to vector<4x128xf32>
    %102 = tpu.concatenate %96, %97, %98, %100, %101 in 0 : vector<1x128xf32>, vector<1x128xf32>, vector<1x128xf32>, vector<1x128xf32>, vector<4x128xf32> -> vector<8x128xf32>
    %c0_50 = arith.constant 0 : index
    %c0_51 = arith.constant 0 : index
    %103 = vector.load %arg2[%c0_50, %c0_51] : memref<8x128xf32, #tpu.memory_space<vmem>>, vector<8x128xf32>
    tpu.vector_store %arg2[%c0_50, %c0_51], %102 {strides = array<i32>} : memref<8x128xf32, #tpu.memory_space<vmem>>, vector<8x128xf32>,
    return
  }
}

</mosaic_0001>

<llo_original>
// kernel: tpu_custom_call.1
$region0: #{tpu_custom_call.1}
  #allocation0 [shape = 'u32[]', space=smem, size = 0x4, offset = 0x4, fixed_abs, tag = 'smem constant byte address 0x4 - core index']
  #allocation1 [shape = 'u32[72,128]{1,0:T(1,128)}', space=vmem, size = 0x9000, scoped, tag = 'internal scratch']
  %s0 = inlined_call_operand.hbm [shape: f32[96,128], index: 0, kind: input, shape index: {}]
  %s1 = inlined_call_operand.hbm [shape: f32[8,128], index: 1, kind: input, shape index: {}]
  %s2 = inlined_call_operand.hbm [shape: f32[8,128], index: 2, kind: output, shape index: {}]
  %s3 = sld [smem:[#allocation0]]
  $region26: #{tpu_custom_call.1} parent=0
    _
  %s5 = ssub.s32 1, %s3
  %s6 = scalar_select 0, %s5, %s3
  $region1: #{tpu_custom_call.1} parent=0
    #allocation2 [shape = 'u8[49152]{0}', space=vmem, size = 0xc000, scoped, tag = 'input window, operand 0, single buffered']
    #allocation3 [shape = 's32[1]{0}', space=sflag, size = 0x4, scoped, tag = 'scoped memory for tpu_custom_call.1']
    #allocation4 [shape = 's32[1]{0}', space=sflag, size = 0x4, scoped, tag = 'scoped memory for tpu_custom_call.1']
    #allocation5 [shape = 'u8[4096]{0}', space=vmem, size = 0x1000, scoped, tag = 'input window, operand 1, single buffered']
    #allocation6 [shape = 's32[1]{0}', space=sflag, size = 0x4, scoped, tag = 'scoped memory for tpu_custom_call.1']
    #allocation7 [shape = 'u8[4096]{0}', space=vmem, size = 0x1000, scoped, tag = 'output window, operand 0, single buffered']
    %7 = vsyncpa [#allocation3], 0
    %8 = vsyncpa [#allocation6], 0
    %9 = vsyncpa [#allocation4], 0
    // Predicated region
    $region2: #{tpu_custom_call.1} parent=1 // pred_check
      _
    $region3: #{tpu_custom_call.1} parent=1 // pred_check_branch
      %11 = sbr.rel (0) target = $region5
    $region4: #{tpu_custom_call.1} parent=1 // pred_region
      %13 = vsyncadd [#allocation3], 0
      %s14 = sshll.u32 %s0, 4
      %s15 = int_to_ptr.hbm [resolvable:$true] %s14
      %s16 = sshll.u32 [#allocation2], 4
      %s17 = int_to_ptr.vmem [resolvable:$true] %s16
      %22 = dma.hbm_to_vmem [thread:$0]  %s15, 1536, %s17, [#allocation3], 128, 128, 8
    $region5: #{tpu_custom_call.1} parent=1 // pred_fallthru
      _
    // Predicated region
    $region6: #{tpu_custom_call.1} parent=1 // pred_check
      _
    $region7: #{tpu_custom_call.1} parent=1 // pred_check_branch
      %24 = sbr.rel (0) target = $region9
    $region8: #{tpu_custom_call.1} parent=1 // pred_region
      %26 = vsyncadd [#allocation6], 0
      %s28 = sshll.u32 %s1, 4
      %s29 = int_to_ptr.hbm [resolvable:$true] %s28
      %s30 = sshll.u32 [#allocation5], 4
      %s31 = int_to_ptr.vmem [resolvable:$true] %s30
      %33 = dma.hbm_to_vmem [thread:$0]  %s29, 128, %s31, [#allocation6]
    $region9: #{tpu_custom_call.1} parent=1 // pred_fallthru
      _
    // Predicated region
    $region10: #{tpu_custom_call.1} parent=1 // pred_check
      _
    $region11: #{tpu_custom_call.1} parent=1 // pred_check_branch
      %35 = sbr.rel (0) target = $region13
    $region12: #{tpu_custom_call.1} parent=1 // pred_region
      %37 = dma.done [#allocation3], 1536
    $region13: #{tpu_custom_call.1} parent=1 // pred_fallthru
      _
    // Predicated region
    $region14: #{tpu_custom_call.1} parent=1 // pred_check
      _
    $region15: #{tpu_custom_call.1} parent=1 // pred_check_branch
      %39 = sbr.rel (0) target = $region17
    $region16: #{tpu_custom_call.1} parent=1 // pred_region
      %41 = dma.done [#allocation6], 128
    $region17: #{tpu_custom_call.1} parent=1 // pred_fallthru
      _
    %v42 = vld [vmem:[#allocation2] sm:$0xff]
    %v43 = vld [vmem:[#allocation2 + $0x8] sm:$0xff]
    %v44 = vld [vmem:[#allocation2 + $0x10] sm:$0xff]
    %v45 = vld [vmem:[#allocation2 + $0x18] sm:$0xff]
    %v46 = vld [vmem:[#allocation2 + $0x20] sm:$0xff]
    %v47 = vld [vmem:[#allocation2 + $0x28] sm:$0xff]
    %v48 = vld [vmem:[#allocation2 + $0x30] sm:$0xff]
    %v49 = vld [vmem:[#allocation2 + $0x38] sm:$0xff]
    %v50 = vld [vmem:[#allocation2 + $0x40] sm:$0xff]
    %v51 = vld [vmem:[#allocation2 + $0x48] sm:$0xff]
    %v52 = vld [vmem:[#allocation2 + $0x50] sm:$0xff]
    %v53 = vld [vmem:[#allocation2 + $0x58] sm:$0x1]
    %v54 = vld [vmem:[#allocation2 + $0x59] sm:$0x1]
    %v55 = vld [vmem:[#allocation2 + $0x5a] sm:$0x1]
    %v56 = vld [vmem:[#allocation2 + $0x5b] sm:$0x1]
    %v57 = vld [vmem:[#allocation2 + $0x5c] sm:$0x1]
    %v58 = vld [vmem:[#allocation5] sm:$0x1]
    %v59 = vld [vmem:[#allocation5 + $0x1] sm:$0x1]
    %v60 = vlaneseq
    %v61 = vshrl.u32 %v60, 7
    %v62 = vlaneseq
    %v63 = vand.u32 %v62, 127
    %v64 = vadd.s32 %v63, 128
    %v65 = vshra.s32 %v63, %v61
    %v66 = vshra.s32 %v64, %v61
    %v67 = vand.u32 %v65, 1
    %v68 = vand.u32 %v66, 1
    %v69 = vcvt.s32.f32 %v67
    %v70 = vcvt.s32.f32 %v68
    %72 = vset.pattern.permute.xlu0 8
    %73 = vperm.xlu0 %72, %v51
    %v74 = vpop.permute.xlu0 %73
    %77 = vset.pattern.permute.xlu0 8
    %78 = vperm.xlu0 %77, %v52
    %v79 = vpop.permute.xlu0 %78
    %vm81 = vcmask 64512
    %v82 = vsel %vm81, %v51, 0
    %v84 = vsel %vm81, %v52, 0
    %86 = vmatpush.msra.mxu0 0.0
    %87 = vmatpush.msra.mxu0 0.0
    %88 = vmatpush.msra.mxu0 0.0
    %89 = vmatpush.msra.mxu0 0.0
    %90 = vmatpush.msra.mxu0 0.0
    %91 = vmatpush.msra.mxu0 0.0
    %92 = vmatpush.msra.mxu0 0.0
    %93 = vmatpush.msra.mxu0 0.0
    %94 = vmatpush.msra.mxu0 0.0
    %95 = vmatpush.msra.mxu0 0.0
    %96 = vmatpush.msra.mxu0 0.0
    %97 = vmatpush.msra.mxu0 0.0
    %98 = vmatpush.msra.mxu0 0.0
    %99 = vmatpush.msra.mxu0 0.0
    %100 = vmatpush.msra.mxu0 0.0
    %101 = vmatpush.msra.mxu0 %v69
    %102 = vmatmul.f32.gmra.mxu0 %v82
    %v103 = vpop.f32.mrf.mxu0
    %v104 = vadd.f32 %v74, %v103
    %105 = vmatmul.f32.gmra.mxu0 %v84
    %v106 = vpop.f32.mrf.mxu0
    %v107 = vadd.f32 %v79, %v106
    %108 = vdwg.mxu0
    %109 = vmatpush.msra.mxu0 0.0
    %110 = vmatpush.msra.mxu0 0.0
    %111 = vmatpush.msra.mxu0 0.0
    %112 = vmatpush.msra.mxu0 0.0
    %113 = vmatpush.msra.mxu0 0.0
    %114 = vmatpush.msra.mxu0 0.0
    %115 = vmatpush.msra.mxu0 0.0
    %116 = vmatpush.msra.mxu0 0.0
    %117 = vmatpush.msra.mxu0 0.0
    %118 = vmatpush.msra.mxu0 0.0
    %119 = vmatpush.msra.mxu0 0.0
    %120 = vmatpush.msra.mxu0 0.0
    %121 = vmatpush.msra.mxu0 0.0
    %122 = vmatpush.msra.mxu0 0.0
    %123 = vmatpush.msra.mxu0 0.0
    %124 = vmatpush.msra.mxu0 %v70
    %125 = vmatmul.f32.gmra.mxu0 %v82
    %v126 = vpop.f32.mrf.mxu0
    %v127 = vadd.f32 %v74, %v126
    %128 = vmatmul.f32.gmra.mxu0 %v84
    %v129 = vpop.f32.mrf.mxu0
    %v130 = vadd.f32 %v79, %v129
    %131 = vdwg.mxu0
    %v132 = vmax.f32 %v104, 0.0
    %v133 = vmax.f32 %v127, 0.0
    %v134 = vmax.f32 %v107, 0.0
    %v135 = vmax.f32 %v130, 0.0
    %137 = vset.pattern.permute.xlu0 0
    %138 = vperm.xlu0 %137, %v57
    %v139 = vpop.permute.xlu0 %138
    %vm141 = vcmask 130048
    %v143 = vsel %vm141, %v56, 0
    %145 = vmatpush.msra.mxu0 0.0
    %146 = vmatpush.msra.mxu0 0.0
    %147 = vmatpush.msra.mxu0 0.0
    %148 = vmatpush.msra.mxu0 0.0
    %149 = vmatpush.msra.mxu0 0.0
    %150 = vmatpush.msra.mxu0 0.0
    %151 = vmatpush.msra.mxu0 0.0
    %152 = vmatpush.msra.mxu0 0.0
    %153 = vmatpush.msra.mxu0 0.0
    %154 = vmatpush.msra.mxu0 0.0
    %155 = vmatpush.msra.mxu0 0.0
    %156 = vmatpush.msra.mxu0 0.0
    %157 = vmatpush.msra.mxu0 0.0
    %158 = vmatpush.msra.mxu0 0.0
    %159 = vmatpush.msra.mxu0 %v134
    %160 = vmatpush.msra.mxu0 %v132
    %161 = vmatmul.f32.gmra.mxu0 %v143
    %v162 = vpop.f32.mrf.mxu0
    %v163 = vadd.f32 %v139, %v162
    %164 = vdwg.mxu0
    %165 = vmatpush.msra.mxu0 0.0
    %166 = vmatpush.msra.mxu0 0.0
    %167 = vmatpush.msra.mxu0 0.0
    %168 = vmatpush.msra.mxu0 0.0
    %169 = vmatpush.msra.mxu0 0.0
    %170 = vmatpush.msra.mxu0 0.0
    %171 = vmatpush.msra.mxu0 0.0
    %172 = vmatpush.msra.mxu0 0.0
    %173 = vmatpush.msra.mxu0 0.0
    %174 = vmatpush.msra.mxu0 0.0
    %175 = vmatpush.msra.mxu0 0.0
    %176 = vmatpush.msra.mxu0 0.0
    %177 = vmatpush.msra.mxu0 0.0
    %178 = vmatpush.msra.mxu0 0.0
    %179 = vmatpush.msra.mxu0 %v135
    %180 = vmatpush.msra.mxu0 %v133
    %181 = vmatmul.f32.gmra.mxu0 %v143
    %v182 = vpop.f32.mrf.mxu0
    %v183 = vadd.f32 %v139, %v182
    %184 = vdwg.mxu0
    %v186 = vsel %vm81, %v58, 0
    %188 = vmatpush.msra.mxu0 0.0
    %189 = vmatpush.msra.mxu0 0.0
    %190 = vmatpush.msra.mxu0 0.0
    %191 = vmatpush.msra.mxu0 0.0
    %192 = vmatpush.msra.mxu0 0.0
    %193 = vmatpush.msra.mxu0 0.0
    %194 = vmatpush.msra.mxu0 0.0
    %195 = vmatpush.msra.mxu0 0.0
    %196 = vmatpush.msra.mxu0 0.0
    %197 = vmatpush.msra.mxu0 0.0
    %198 = vmatpush.msra.mxu0 0.0
    %199 = vmatpush.msra.mxu0 0.0
    %200 = vmatpush.msra.mxu0 0.0
    %201 = vmatpush.msra.mxu0 0.0
    %202 = vmatpush.msra.mxu0 0.0
    %203 = vmatpush.msra.mxu0 %v42
    %204 = vmatmul.f32.gmra.mxu0 %v186
    %v205 = vpop.f32.mrf.mxu0
    %v206 = vadd.f32 %v53, %v205
    %207 = vdwg.mxu0
    %v208 = vmax.f32 %v206, 0.0
    %vm209 = vcmask 261120
    %v211 = vsel %vm209, %v208, 0
    %213 = vmatpush.msra.mxu0 0.0
    %214 = vmatpush.msra.mxu0 0.0
    %215 = vmatpush.msra.mxu0 0.0
    %216 = vmatpush.msra.mxu0 0.0
    %217 = vmatpush.msra.mxu0 0.0
    %218 = vmatpush.msra.mxu0 0.0
    %219 = vmatpush.msra.mxu0 0.0
    %220 = vmatpush.msra.mxu0 0.0
    %221 = vmatpush.msra.mxu0 0.0
    %222 = vmatpush.msra.mxu0 0.0
    %223 = vmatpush.msra.mxu0 0.0
    %224 = vmatpush.msra.mxu0 0.0
    %225 = vmatpush.msra.mxu0 %v46
    %226 = vmatpush.msra.mxu0 %v45
    %227 = vmatpush.msra.mxu0 %v44
    %228 = vmatpush.msra.mxu0 %v43
    %229 = vmatmul.f32.gmra.mxu0 %v211
    %v230 = vpop.f32.mrf.mxu0
    %v231 = vadd.f32 %v54, %v230
    %232 = vdwg.mxu0
    %v233 = vmax.f32 %v231, 0.0
    %v235 = vsel %vm209, %v233, 0
    %237 = vmatpush.msra.mxu0 0.0
    %238 = vmatpush.msra.mxu0 0.0
    %239 = vmatpush.msra.mxu0 0.0
    %240 = vmatpush.msra.mxu0 0.0
    %241 = vmatpush.msra.mxu0 0.0
    %242 = vmatpush.msra.mxu0 0.0
    %243 = vmatpush.msra.mxu0 0.0
    %244 = vmatpush.msra.mxu0 0.0
    %245 = vmatpush.msra.mxu0 0.0
    %246 = vmatpush.msra.mxu0 0.0
    %247 = vmatpush.msra.mxu0 0.0
    %248 = vmatpush.msra.mxu0 0.0
    %249 = vmatpush.msra.mxu0 %v50
    %250 = vmatpush.msra.mxu0 %v49
    %251 = vmatpush.msra.mxu0 %v48
    %252 = vmatpush.msra.mxu0 %v47
    %253 = vmatmul.f32.gmra.mxu0 %v235
    %v254 = vpop.f32.mrf.mxu0
    %v255 = vadd.f32 %v55, %v254
    %256 = vdwg.mxu0
    %v258 = vsel %vm81, %v255, 0
    %260 = vmatpush.msra.mxu0 0.0
    %261 = vmatpush.msra.mxu0 0.0
    %262 = vmatpush.msra.mxu0 0.0
    %263 = vmatpush.msra.mxu0 0.0
    %264 = vmatpush.msra.mxu0 0.0
    %265 = vmatpush.msra.mxu0 0.0
    %266 = vmatpush.msra.mxu0 0.0
    %267 = vmatpush.msra.mxu0 0.0
    %268 = vmatpush.msra.mxu0 0.0
    %269 = vmatpush.msra.mxu0 0.0
    %270 = vmatpush.msra.mxu0 0.0
    %271 = vmatpush.msra.mxu0 0.0
    %272 = vmatpush.msra.mxu0 0.0
    %273 = vmatpush.msra.mxu0 0.0
    %274 = vmatpush.msra.mxu0 0.0
    %275 = vmatpush.msra.mxu0 %v42
    %276 = vmatmul.f32.gmra.mxu0 %v258
    %v277 = vpop.f32.mrf.mxu0
    %v278 = vadd.f32 %v53, %v277
    %279 = vdwg.mxu0
    %v280 = vmax.f32 %v278, 0.0
    %v282 = vsel %vm209, %v280, 0
    %284 = vmatpush.msra.mxu0 0.0
    %285 = vmatpush.msra.mxu0 0.0
    %286 = vmatpush.msra.mxu0 0.0
    %287 = vmatpush.msra.mxu0 0.0
    %288 = vmatpush.msra.mxu0 0.0
    %289 = vmatpush.msra.mxu0 0.0
    %290 = vmatpush.msra.mxu0 0.0
    %291 = vmatpush.msra.mxu0 0.0
    %292 = vmatpush.msra.mxu0 0.0
    %293 = vmatpush.msra.mxu0 0.0
    %294 = vmatpush.msra.mxu0 0.0
    %295 = vmatpush.msra.mxu0 0.0
    %296 = vmatpush.msra.mxu0 %v46
    %297 = vmatpush.msra.mxu0 %v45
    %298 = vmatpush.msra.mxu0 %v44
    %299 = vmatpush.msra.mxu0 %v43
    %300 = vmatmul.f32.gmra.mxu0 %v282
    %v301 = vpop.f32.mrf.mxu0
    %v302 = vadd.f32 %v54, %v301
    %303 = vdwg.mxu0
    %v304 = vmax.f32 %v302, 0.0
    %v306 = vsel %vm209, %v304, 0
    %308 = vmatpush.msra.mxu0 0.0
    %309 = vmatpush.msra.mxu0 0.0
    %310 = vmatpush.msra.mxu0 0.0
    %311 = vmatpush.msra.mxu0 0.0
    %312 = vmatpush.msra.mxu0 0.0
    %313 = vmatpush.msra.mxu0 0.0
    %314 = vmatpush.msra.mxu0 0.0
    %315 = vmatpush.msra.mxu0 0.0
    %316 = vmatpush.msra.mxu0 0.0
    %317 = vmatpush.msra.mxu0 0.0
    %318 = vmatpush.msra.mxu0 0.0
    %319 = vmatpush.msra.mxu0 0.0
    %320 = vmatpush.msra.mxu0 %v50
    %321 = vmatpush.msra.mxu0 %v49
    %322 = vmatpush.msra.mxu0 %v48
    %323 = vmatpush.msra.mxu0 %v47
    %324 = vmatmul.f32.gmra.mxu0 %v306
    %v325 = vpop.f32.mrf.mxu0
    %v326 = vadd.f32 %v55, %v325
    %327 = vdwg.mxu0
    %v329 = vsel %vm81, %v326, 0
    %331 = vmatpush.msra.mxu0 0.0
    %332 = vmatpush.msra.mxu0 0.0
    %333 = vmatpush.msra.mxu0 0.0
    %334 = vmatpush.msra.mxu0 0.0
    %335 = vmatpush.msra.mxu0 0.0
    %336 = vmatpush.msra.mxu0 0.0
    %337 = vmatpush.msra.mxu0 0.0
    %338 = vmatpush.msra.mxu0 0.0
    %339 = vmatpush.msra.mxu0 0.0
    %340 = vmatpush.msra.mxu0 0.0
    %341 = vmatpush.msra.mxu0 0.0
    %342 = vmatpush.msra.mxu0 0.0
    %343 = vmatpush.msra.mxu0 0.0
    %344 = vmatpush.msra.mxu0 0.0
    %345 = vmatpush.msra.mxu0 0.0
    %346 = vmatpush.msra.mxu0 %v42
    %347 = vmatmul.f32.gmra.mxu0 %v329
    %v348 = vpop.f32.mrf.mxu0
    %v349 = vadd.f32 %v53, %v348
    %350 = vdwg.mxu0
    %v351 = vmax.f32 %v349, 0.0
    %v353 = vsel %vm209, %v351, 0
    %355 = vmatpush.msra.mxu0 0.0
    %356 = vmatpush.msra.mxu0 0.0
    %357 = vmatpush.msra.mxu0 0.0
    %358 = vmatpush.msra.mxu0 0.0
    %359 = vmatpush.msra.mxu0 0.0
    %360 = vmatpush.msra.mxu0 0.0
    %361 = vmatpush.msra.mxu0 0.0
    %362 = vmatpush.msra.mxu0 0.0
    %363 = vmatpush.msra.mxu0 0.0
    %364 = vmatpush.msra.mxu0 0.0
    %365 = vmatpush.msra.mxu0 0.0
    %366 = vmatpush.msra.mxu0 0.0
    %367 = vmatpush.msra.mxu0 %v46
    %368 = vmatpush.msra.mxu0 %v45
    %369 = vmatpush.msra.mxu0 %v44
    %370 = vmatpush.msra.mxu0 %v43
    %371 = vmatmul.f32.gmra.mxu0 %v353
    %v372 = vpop.f32.mrf.mxu0
    %v373 = vadd.f32 %v54, %v372
    %374 = vdwg.mxu0
    %v375 = vmax.f32 %v373, 0.0
    %v377 = vsel %vm209, %v375, 0
    %379 = vmatpush.msra.mxu0 0.0
    %380 = vmatpush.msra.mxu0 0.0
    %381 = vmatpush.msra.mxu0 0.0
    %382 = vmatpush.msra.mxu0 0.0
    %383 = vmatpush.msra.mxu0 0.0
    %384 = vmatpush.msra.mxu0 0.0
    %385 = vmatpush.msra.mxu0 0.0
    %386 = vmatpush.msra.mxu0 0.0
    %387 = vmatpush.msra.mxu0 0.0
    %388 = vmatpush.msra.mxu0 0.0
    %389 = vmatpush.msra.mxu0 0.0
    %390 = vmatpush.msra.mxu0 0.0
    %391 = vmatpush.msra.mxu0 %v50
    %392 = vmatpush.msra.mxu0 %v49
    %393 = vmatpush.msra.mxu0 %v48
    %394 = vmatpush.msra.mxu0 %v47
    %395 = vmatmul.f32.gmra.mxu0 %v377
    %v396 = vpop.f32.mrf.mxu0
    %v397 = vadd.f32 %v55, %v396
    %398 = vdwg.mxu0
    %v400 = vsel %vm81, %v397, 0
    %402 = vmatpush.msra.mxu0 0.0
    %403 = vmatpush.msra.mxu0 0.0
    %404 = vmatpush.msra.mxu0 0.0
    %405 = vmatpush.msra.mxu0 0.0
    %406 = vmatpush.msra.mxu0 0.0
    %407 = vmatpush.msra.mxu0 0.0
    %408 = vmatpush.msra.mxu0 0.0
    %409 = vmatpush.msra.mxu0 0.0
    %410 = vmatpush.msra.mxu0 0.0
    %411 = vmatpush.msra.mxu0 0.0
    %412 = vmatpush.msra.mxu0 0.0
    %413 = vmatpush.msra.mxu0 0.0
    %414 = vmatpush.msra.mxu0 0.0
    %415 = vmatpush.msra.mxu0 0.0
    %416 = vmatpush.msra.mxu0 0.0
    %417 = vmatpush.msra.mxu0 %v42
    %418 = vmatmul.f32.gmra.mxu0 %v400
    %v419 = vpop.f32.mrf.mxu0
    %v420 = vadd.f32 %v53, %v419
    %421 = vdwg.mxu0
    %v422 = vmax.f32 %v420, 0.0
    %v424 = vsel %vm209, %v422, 0
    %426 = vmatpush.msra.mxu0 0.0
    %427 = vmatpush.msra.mxu0 0.0
    %428 = vmatpush.msra.mxu0 0.0
    %429 = vmatpush.msra.mxu0 0.0
    %430 = vmatpush.msra.mxu0 0.0
    %431 = vmatpush.msra.mxu0 0.0
    %432 = vmatpush.msra.mxu0 0.0
    %433 = vmatpush.msra.mxu0 0.0
    %434 = vmatpush.msra.mxu0 0.0
    %435 = vmatpush.msra.mxu0 0.0
    %436 = vmatpush.msra.mxu0 0.0
    %437 = vmatpush.msra.mxu0 0.0
    %438 = vmatpush.msra.mxu0 %v46
    %439 = vmatpush.msra.mxu0 %v45
    %440 = vmatpush.msra.mxu0 %v44
    %441 = vmatpush.msra.mxu0 %v43
    %442 = vmatmul.f32.gmra.mxu0 %v424
    %v443 = vpop.f32.mrf.mxu0
    %v444 = vadd.f32 %v54, %v443
    %445 = vdwg.mxu0
    %v446 = vmax.f32 %v444, 0.0
    %v448 = vsel %vm209, %v446, 0
    %450 = vmatpush.msra.mxu0 0.0
    %451 = vmatpush.msra.mxu0 0.0
    %452 = vmatpush.msra.mxu0 0.0
    %453 = vmatpush.msra.mxu0 0.0
    %454 = vmatpush.msra.mxu0 0.0
    %455 = vmatpush.msra.mxu0 0.0
    %456 = vmatpush.msra.mxu0 0.0
    %457 = vmatpush.msra.mxu0 0.0
    %458 = vmatpush.msra.mxu0 0.0
    %459 = vmatpush.msra.mxu0 0.0
    %460 = vmatpush.msra.mxu0 0.0
    %461 = vmatpush.msra.mxu0 0.0
    %462 = vmatpush.msra.mxu0 %v50
    %463 = vmatpush.msra.mxu0 %v49
    %464 = vmatpush.msra.mxu0 %v48
    %465 = vmatpush.msra.mxu0 %v47
    %466 = vmatmul.f32.gmra.mxu0 %v448
    %v467 = vpop.f32.mrf.mxu0
    %v468 = vadd.f32 %v55, %v467
    %469 = vdwg.mxu0
    %v471 = vsel %vm81, %v468, 0
    %473 = vmatpush.msra.mxu0 0.0
    %474 = vmatpush.msra.mxu0 0.0
    %475 = vmatpush.msra.mxu0 0.0
    %476 = vmatpush.msra.mxu0 0.0
    %477 = vmatpush.msra.mxu0 0.0
    %478 = vmatpush.msra.mxu0 0.0
    %479 = vmatpush.msra.mxu0 0.0
    %480 = vmatpush.msra.mxu0 0.0
    %481 = vmatpush.msra.mxu0 0.0
    %482 = vmatpush.msra.mxu0 0.0
    %483 = vmatpush.msra.mxu0 0.0
    %484 = vmatpush.msra.mxu0 0.0
    %485 = vmatpush.msra.mxu0 0.0
    %486 = vmatpush.msra.mxu0 0.0
    %487 = vmatpush.msra.mxu0 0.0
    %488 = vmatpush.msra.mxu0 %v42
    %489 = vmatmul.f32.gmra.mxu0 %v471
    %v490 = vpop.f32.mrf.mxu0
    %v491 = vadd.f32 %v53, %v490
    %492 = vdwg.mxu0
    %v493 = vmax.f32 %v491, 0.0
    %v495 = vsel %vm209, %v493, 0
    %497 = vmatpush.msra.mxu0 0.0
    %498 = vmatpush.msra.mxu0 0.0
    %499 = vmatpush.msra.mxu0 0.0
    %500 = vmatpush.msra.mxu0 0.0
    %501 = vmatpush.msra.mxu0 0.0
    %502 = vmatpush.msra.mxu0 0.0
    %503 = vmatpush.msra.mxu0 0.0
    %504 = vmatpush.msra.mxu0 0.0
    %505 = vmatpush.msra.mxu0 0.0
    %506 = vmatpush.msra.mxu0 0.0
    %507 = vmatpush.msra.mxu0 0.0
    %508 = vmatpush.msra.mxu0 0.0
    %509 = vmatpush.msra.mxu0 %v46
    %510 = vmatpush.msra.mxu0 %v45
    %511 = vmatpush.msra.mxu0 %v44
    %512 = vmatpush.msra.mxu0 %v43
    %513 = vmatmul.f32.gmra.mxu0 %v495
    %v514 = vpop.f32.mrf.mxu0
    %v515 = vadd.f32 %v54, %v514
    %516 = vdwg.mxu0
    %v517 = vmax.f32 %v515, 0.0
    %v519 = vsel %vm209, %v517, 0
    %521 = vmatpush.msra.mxu0 0.0
    %522 = vmatpush.msra.mxu0 0.0
    %523 = vmatpush.msra.mxu0 0.0
    %524 = vmatpush.msra.mxu0 0.0
    %525 = vmatpush.msra.mxu0 0.0
    %526 = vmatpush.msra.mxu0 0.0
    %527 = vmatpush.msra.mxu0 0.0
    %528 = vmatpush.msra.mxu0 0.0
    %529 = vmatpush.msra.mxu0 0.0
    %530 = vmatpush.msra.mxu0 0.0
    %531 = vmatpush.msra.mxu0 0.0
    %532 = vmatpush.msra.mxu0 0.0
    %533 = vmatpush.msra.mxu0 %v50
    %534 = vmatpush.msra.mxu0 %v49
    %535 = vmatpush.msra.mxu0 %v48
    %536 = vmatpush.msra.mxu0 %v47
    %537 = vmatmul.f32.gmra.mxu0 %v519
    %v538 = vpop.f32.mrf.mxu0
    %v539 = vadd.f32 %v55, %v538
    %540 = vdwg.mxu0
    %v542 = vsel %vm81, %v539, 0
    %544 = vmatpush.msra.mxu0 0.0
    %545 = vmatpush.msra.mxu0 0.0
    %546 = vmatpush.msra.mxu0 0.0
    %547 = vmatpush.msra.mxu0 0.0
    %548 = vmatpush.msra.mxu0 0.0
    %549 = vmatpush.msra.mxu0 0.0
    %550 = vmatpush.msra.mxu0 0.0
    %551 = vmatpush.msra.mxu0 0.0
    %552 = vmatpush.msra.mxu0 0.0
    %553 = vmatpush.msra.mxu0 0.0
    %554 = vmatpush.msra.mxu0 0.0
    %555 = vmatpush.msra.mxu0 0.0
    %556 = vmatpush.msra.mxu0 0.0
    %557 = vmatpush.msra.mxu0 0.0
    %558 = vmatpush.msra.mxu0 0.0
    %559 = vmatpush.msra.mxu0 %v69
    %560 = vmatmul.f32.gmra.mxu0 %v542
    %v561 = vpop.f32.mrf.mxu0
    %v562 = vadd.f32 %v163, %v561
    %563 = vdwg.mxu0
    %564 = vmatpush.msra.mxu0 0.0
    %565 = vmatpush.msra.mxu0 0.0
    %566 = vmatpush.msra.mxu0 0.0
    %567 = vmatpush.msra.mxu0 0.0
    %568 = vmatpush.msra.mxu0 0.0
    %569 = vmatpush.msra.mxu0 0.0
    %570 = vmatpush.msra.mxu0 0.0
    %571 = vmatpush.msra.mxu0 0.0
    %572 = vmatpush.msra.mxu0 0.0
    %573 = vmatpush.msra.mxu0 0.0
    %574 = vmatpush.msra.mxu0 0.0
    %575 = vmatpush.msra.mxu0 0.0
    %576 = vmatpush.msra.mxu0 0.0
    %577 = vmatpush.msra.mxu0 0.0
    %578 = vmatpush.msra.mxu0 0.0
    %579 = vmatpush.msra.mxu0 %v70
    %580 = vmatmul.f32.gmra.mxu0 %v542
    %v581 = vpop.f32.mrf.mxu0
    %v582 = vadd.f32 %v183, %v581
    %583 = vdwg.mxu0
    %vm584 = vcmask 1040384
    %v585 = vsel %vm584, %v562, -inf
    %v586 = vsel %vm584, %v582, -inf
    %v587 = vmax.f32 %v585, %v586
    %588 = vmax.xlane.f32.xlu0 %v587
    %v589 = vpop.xlane.xlu0 %588
    %v590 = vsub.f32 %v562, %v589
    %v591 = vsub.f32 %v582, %v589
    %v592 = vmul.f32 %v590, 1.442695
    %v593 = vpow.pop %v592
    %v594 = vmul.f32 %v591, 1.442695
    %v595 = vpow.pop %v594
    %v596 = vsel %vm584, %v593, 0.0
    %v597 = vsel %vm584, %v595, 0.0
    %v598 = vadd.f32 %v596, %v597
    %599 = vadd.xlane.f32.xlu0 %v598
    %v600 = vpop.xlane.xlu0 %599
    %601 = vmatpush.xpose.msra.mxu0 0.0
    %602 = vmatpush.xpose.msra.mxu0 0.0
    %603 = vmatpush.xpose.msra.mxu0 0.0
    %604 = vmatpush.xpose.msra.mxu0 0.0
    %605 = vmatpush.xpose.msra.mxu0 0.0
    %606 = vmatpush.xpose.msra.mxu0 0.0
    %607 = vmatpush.xpose.msra.mxu0 0.0
    %608 = vmatpush.xpose.msra.mxu0 0.0
    %609 = vmatpush.xpose.msra.mxu0 0.0
    %610 = vmatpush.xpose.msra.mxu0 0.0
    %611 = vmatpush.xpose.msra.mxu0 0.0
    %612 = vmatpush.xpose.msra.mxu0 0.0
    %613 = vmatpush.xpose.msra.mxu0 0.0
    %614 = vmatpush.xpose.msra.mxu0 0.0
    %615 = vmatpush.xpose.msra.mxu0 0.0
    %616 = vmatpush.xpose.msra.mxu0 %v69
    %617 = vmatmul.f32.gmra.mxu0 %v593
    %v618 = vpop.f32.mrf.mxu0
    %v619 = vadd.f32 0.0, %v618
    %620 = vdwg.mxu0
    %621 = vmatpush.xpose.msra.mxu0 0.0
    %622 = vmatpush.xpose.msra.mxu0 0.0
    %623 = vmatpush.xpose.msra.mxu0 0.0
    %624 = vmatpush.xpose.msra.mxu0 0.0
    %625 = vmatpush.xpose.msra.mxu0 0.0
    %626 = vmatpush.xpose.msra.mxu0 0.0
    %627 = vmatpush.xpose.msra.mxu0 0.0
    %628 = vmatpush.xpose.msra.mxu0 0.0
    %629 = vmatpush.xpose.msra.mxu0 0.0
    %630 = vmatpush.xpose.msra.mxu0 0.0
    %631 = vmatpush.xpose.msra.mxu0 0.0
    %632 = vmatpush.xpose.msra.mxu0 0.0
    %633 = vmatpush.xpose.msra.mxu0 0.0
    %634 = vmatpush.xpose.msra.mxu0 0.0
    %635 = vmatpush.xpose.msra.mxu0 0.0
    %636 = vmatpush.xpose.msra.mxu0 %v70
    %637 = vmatmul.f32.gmra.mxu0 %v595
    %v638 = vpop.f32.mrf.mxu0
    %v639 = vadd.f32 %v619, %v638
    %640 = vdwg.mxu0
    %v641 = vrcp.pop %v600
    %v642 = vmul.f32 %v600, %v641
    %v643 = vsub.f32 1.0, %v642
    %v644 = vmul.f32 %v641, %v643
    %v645 = vadd.f32 %v641, %v644
    %vm646 = vweird.f32 %v600
    %vm647 = vweird.f32 %v641
    %vm648 = vmor %vm646, %vm647
    %v649 = vsel %vm648, %v641, %v645
    %v650 = vand.u32 2147483647, %v600
    %vm651 = vcmp.eq.f32.partialorder %v650, 8.507059e+37
    %v652 = vand.u32 %v600, 2147483648
    %v653 = vor.u32 1.1754944e-38, %v652
    %v654 = vsel %vm651, %v653, %v649
    %v655 = vmul.f32 %v639, %v654
    %v656 = vsub.f32 %v655, %v59
    %v657 = vmul.f32 %v539, %v656
    %vm658 = vcmask 57344
    %v659 = vsel %vm658, %v657, 0.0
    %660 = vadd.xlane.f32.xlu0 %v659
    %v661 = vpop.xlane.xlu0 %660
    %v662 = vsel %vm81, %v539, 0.0
    %v663 = vsel %vm81, %v655, 0.0
    %v664 = vsel %vm81, %v656, 0.0
    %vm665 = vcmask 7168
    %v666 = vsel %vm665, %v661, 0.0
    %v668 = vrot.slane %v663, 7
    %v671 = vrot.slane %v664, 6
    %v674 = vrot.slane %v666, 5
    %v676 = vsel %vm584, %v662, %v668
    %vm677 = vcmask 1041408
    %v678 = vsel %vm677, %v676, %v671
    %vm679 = vcmask 1042432
    %v680 = vsel %vm679, %v678, %v674
    %vm681 = vcmask 1043456
    %v682 = vsel %vm681, %v680, 0.0
    %683 = vst [vmem:[#allocation7] sm:$0xff] %v682
    // Predicated region
    $region18: #{tpu_custom_call.1} parent=1 // pred_check
      _
    $region19: #{tpu_custom_call.1} parent=1 // pred_check_branch
      %685 = sbr.rel (0) target = $region21
    $region20: #{tpu_custom_call.1} parent=1 // pred_region
      %687 = vsyncadd [#allocation4], 0
      %s689 = sshll.u32 [#allocation7], 4
      %s690 = int_to_ptr.vmem [resolvable:$true] %s689
      %s691 = sshll.u32 %s2, 4
      %s692 = int_to_ptr.hbm [resolvable:$true] %s691
      %694 = dma.vmem_to_hbm [thread:$0]  %s690, 128, %s692, [#allocation4]
    $region21: #{tpu_custom_call.1} parent=1 // pred_fallthru
      _
    // Predicated region
    $region22: #{tpu_custom_call.1} parent=1 // pred_check
      _
    $region23: #{tpu_custom_call.1} parent=1 // pred_check_branch
      %696 = sbr.rel (0) target = $region25
    $region24: #{tpu_custom_call.1} parent=1 // pred_region
      %698 = dma.done [#allocation4], 128
    $region25: #{tpu_custom_call.1} parent=1 // pred_fallthru
      _
    %699 = vsyncpa [#allocation3], 1
    %700 = vsyncpa [#allocation6], 1
    %701 = vsyncpa [#allocation4], 1

</llo_original>
